<compile_context>
chip_gen: v7x
topology: tpu7x:2x2x1
jax: 0.10.0
libtpu: 0.0.40
codegen_flags: <defaults>
</compile_context>

<pallas_src>
import functools

import jax
import jax.numpy as jnp
from jax.experimental import pallas as pl
from jax.experimental.pallas import tpu as pltpu


# ---------------------------------------------------------------------------
# Kernel
# ---------------------------------------------------------------------------
def _fused_heads_kernel(x_ref, w_ref, b_ref, o_ref, acc_ref):
    """One (head, m, k) grid step: accumulate x@w, finalize with bias+ReLU."""
    k = pl.program_id(2)

    @pl.when(k == 0)
    def _init():
        acc_ref[...] = jnp.zeros_like(acc_ref)

    acc_ref[...] += jnp.dot(
        x_ref[...], w_ref[...], preferred_element_type=jnp.float32
    )

    @pl.when(k == pl.num_programs(2) - 1)
    def _finalize():
        y = acc_ref[...] + b_ref[...]          # (tm, N_pad) + (1, N_pad)
        o_ref[...] = jnp.maximum(y, 0.0).astype(o_ref.dtype)


# ---------------------------------------------------------------------------
# Wrapper (layout plumbing + pallas_call)
# ---------------------------------------------------------------------------
def _round_up(x, m):
    return ((x + m - 1) // m) * m


def _pad2d(a, rows, cols):
    r, c = a.shape
    return jnp.pad(a, ((0, rows - r), (0, cols - c)))


def _fused_heads(xs, ws, bs, *, compute_dtype=jnp.float32):
    """relu(x_i @ w_i + b_i) for all heads i, in one fused Pallas kernel."""
    n_heads = len(xs)
    B = xs[0].shape[0]
    d_out = ws[0].shape[1]
    assert all(w.shape[1] == d_out for w in ws)

    # --- padded / tiled geometry -------------------------------------------
    B_pad = _round_up(B, 8)            # f32 sublane alignment (no masked rows)
    tm = min(B_pad, 256)               # M tile; 256 fills v6e/v7x MXU rows
    B_pad = _round_up(B_pad, tm)
    N_pad = _round_up(d_out, 128)      # lane-dense output -> unmasked stores
    max_k = max(x.shape[1] for x in xs)
    K_pad = _round_up(max_k, 128)
    tk = min(K_pad, 512)               # K reduction tile (bounded VMEM)
    K_pad = _round_up(K_pad, tk)
    mt, kt = B_pad // tm, K_pad // tk

    # --- stack all heads into padded slabs (zero-pad => exact math) ---------
    # NOTE: weights could be cast to bfloat16 here (compute_dtype=jnp.bfloat16)
    # for realistic shapes on v6e/v7x; accumulation stays f32 either way.
    x_stack = jnp.stack([_pad2d(x.astype(compute_dtype), B_pad, K_pad) for x in xs])
    w_stack = jnp.stack([_pad2d(w.astype(compute_dtype), K_pad, N_pad) for w in ws])
    b_stack = jnp.stack(
        [_pad2d(b.reshape(1, -1).astype(jnp.float32), 1, N_pad) for b in bs]
    )

    itemsize = jnp.dtype(compute_dtype).itemsize
    flops = 2 * n_heads * B_pad * K_pad * N_pad
    bytes_accessed = (
        x_stack.size * itemsize
        + w_stack.size * itemsize
        + b_stack.size * 4
        + n_heads * B_pad * N_pad * 4
    )

    out = pl.pallas_call(
        _fused_heads_kernel,
        out_shape=jax.ShapeDtypeStruct((n_heads, B_pad, N_pad), jnp.float32),
        grid_spec=pltpu.PrefetchScalarGridSpec(
            num_scalar_prefetch=0,
            grid=(n_heads, mt, kt),
            in_specs=[
                # x: (heads, B_pad, K_pad) -> kernel sees (tm, tk)
                pl.BlockSpec((None, tm, tk), lambda h, m, k: (h, m, k)),
                # w: (heads, K_pad, N_pad) -> kernel sees (tk, N_pad)
                pl.BlockSpec((None, tk, N_pad), lambda h, m, k: (h, k, 0)),
                # b: (heads, 1, N_pad)     -> kernel sees (1, N_pad)
                pl.BlockSpec((None, 1, N_pad), lambda h, m, k: (h, 0, 0)),
            ],
            out_specs=pl.BlockSpec((None, tm, N_pad), lambda h, m, k: (h, m, 0)),
            scratch_shapes=[pltpu.VMEM((tm, N_pad), jnp.float32)],
        ),
        compiler_params=pltpu.CompilerParams(
            # head & M axes shard across v7x's 2 TensorCores; K is the reduction.
            dimension_semantics=("parallel", "parallel", "arbitrary"),
            # Explicit, conservative scoped-VMEM budget: safe on v5e (128 MiB
            # phys), v6e (128 MiB) and v7x (64 MiB phys / 32 MiB default).
            vmem_limit_bytes=32 * 1024 * 1024,
        ),
        cost_estimate=pl.CostEstimate(
            flops=flops, transcendentals=0, bytes_accessed=bytes_accessed
        ),
    )(x_stack, w_stack, b_stack)

    # Split the lane-dense slab back into per-head (B, d_out) outputs.
    return [out[i, :B, :d_out] for i in range(n_heads)]


def init_params(key, d_audio, d_video, d_text, d_out):
    """Deterministic parameter init for the three sub-networks."""
    ks = jax.random.split(key, 6)
    scale = 0.02
    return {
        "audio": {
            "w": scale * jax.random.normal(ks[0], (d_audio, d_out), jnp.float32),
            "b": scale * jax.random.normal(ks[1], (d_out,), jnp.float32),
        },
        "video": {
            "w": scale * jax.random.normal(ks[2], (d_video, d_out), jnp.float32),
            "b": scale * jax.random.normal(ks[3], (d_out,), jnp.float32),
        },
        "text": {
            "w": scale * jax.random.normal(ks[4], (d_text, d_out), jnp.float32),
            "b": scale * jax.random.normal(ks[5], (d_out,), jnp.float32),
        },
    }


@jax.jit
def combined_network(params, input_audio, input_video, input_text):
    """Forward pass of CombinedNetwork: dict {'audio','video','text'}."""
    B = input_audio.shape[0]
    xs = [
        input_audio,                       # (B, D_audio)
        input_video.reshape(B, -1),        # (B, C*H*W)
        input_text.reshape(B, -1),         # (B, S*D_text)
    ]
    ws = [params["audio"]["w"], params["video"]["w"], params["text"]["w"]]
    bs = [params["audio"]["b"], params["video"]["b"], params["text"]["b"]]

    audio_out, video_out, text_out = _fused_heads(xs, ws, bs)

    out = {}
    out["audio"], out["video"], out["text"] = audio_out, video_out, text_out
    return out


# ---------------------------------------------------------------------------
# Demo / self-check
# ---------------------------------------------------------------------------
if __name__ == "__main__":
    key = jax.random.PRNGKey(0)
    k_a, k_v, k_t, k_p = jax.random.split(key, 4)

    # Small shapes consistent with the forward pass.
    B = 2
    D_AUDIO = 32                 # audio feature dim
    C, H, W = 4, 16, 16          # video NCHW
    S, D_TEXT = 8, 32            # text (seq, hidden)
    D_OUT = 16                   # each sub-net's output dim

    input_audio = jax.random.normal(k_a, (B, D_AUDIO), jnp.float32)
    input_video = jax.random.normal(k_v, (B, C, H, W), jnp.float32)
    input_text = jax.random.normal(k_t, (B, S, D_TEXT), jnp.float32)

    params = init_params(k_p, D_AUDIO, C * H * W, S * D_TEXT, D_OUT)

    out = combined_network(params, input_audio, input_video, input_text)
    jax.block_until_ready(out)

    # Sanity check against a pure-JAX reference of the same forward pass.
    def ref(x, w, b):
        return jnp.maximum(x @ w + b, 0.0)

    ref_audio = ref(input_audio, params["audio"]["w"], params["audio"]["b"])
    ref_video = ref(input_video.reshape(B, -1), params["video"]["w"], params["video"]["b"])
    ref_text = ref(input_text.reshape(B, -1), params["text"]["w"], params["text"]["b"])

    assert out["audio"].shape == (B, D_OUT)
    assert out["video"].shape == (B, D_OUT)
    assert out["text"].shape == (B, D_OUT)
    assert jnp.allclose(out["audio"], ref_audio, atol=1e-4)
    assert jnp.allclose(out["video"], ref_video, atol=1e-4)
    assert jnp.allclose(out["text"], ref_text, atol=1e-4)

    print("KERNEL_OK")
</pallas_src>

<mosaic_0001>
module attributes {stable_mosaic.version = 11 : i64} {
  func.func @_fused_heads_kernel(%arg0: i32, %arg1: i32, %arg2: i32, %arg3: memref<1x8x512xf32, #tpu.memory_space<vmem>>, %arg4: memref<1x512x128xf32, #tpu.memory_space<vmem>>, %arg5: memref<1x1x128xf32, #tpu.memory_space<vmem>>, %arg6: memref<1x8x128xf32, #tpu.memory_space<vmem>>, %arg7: memref<8x128xf32, #tpu.memory_space<vmem>>) attributes {dimension_semantics = [#tpu.dimension_semantics<parallel>, #tpu.dimension_semantics<parallel>, #tpu.dimension_semantics<arbitrary>], iteration_bounds = array<i64: 3, 1, 2>, scalar_prefetch = 0 : i64, scratch_operands = 1 : i64, tpu.core_type = #tpu.core_type<tc>, window_params = [{transform_indices = @transform_0, window_bounds = array<i64: 1, 8, 512>}, {transform_indices = @transform_1, window_bounds = array<i64: 1, 512, 128>}, {transform_indices = @transform_2, window_bounds = array<i64: 1, 1, 128>}, {transform_indices = @transform_3, window_bounds = array<i64: 1, 8, 128>}]} {
    %c0_i32 = arith.constant 0 : i32
    %0 = arith.cmpi eq, %arg2, %c0_i32 : i32
    %1 = arith.extui %0 : i1 to i32
    %c0_i32_0 = arith.constant 0 : i32
    %2 = arith.cmpi ne, %1, %c0_i32_0 : i32
    scf.if %2 {
      %cst_11 = arith.constant 0.000000e+00 : f32
      %14 = vector.broadcast %cst_11 : f32 to vector<8x128xf32>
      %c0_12 = arith.constant 0 : index
      %c0_13 = arith.constant 0 : index
      %15 = vector.load %arg7[%c0_12, %c0_13] : memref<8x128xf32, #tpu.memory_space<vmem>>, vector<8x128xf32>
      tpu.vector_store %arg7[%c0_12, %c0_13], %14 {strides = array<i32>} : memref<8x128xf32, #tpu.memory_space<vmem>>, vector<8x128xf32>,
    } else {
    }
    %c0 = arith.constant 0 : index
    %c0_1 = arith.constant 0 : index
    %3 = vector.load %arg7[%c0, %c0_1] : memref<8x128xf32, #tpu.memory_space<vmem>>, vector<8x128xf32>
    %c0_2 = arith.constant 0 : index
    %c0_3 = arith.constant 0 : index
    %c0_4 = arith.constant 0 : index
    %4 = vector.load %arg3[%c0_2, %c0_3, %c0_4] : memref<1x8x512xf32, #tpu.memory_space<vmem>>, vector<1x8x512xf32>
    %5 = vector.shape_cast %4 : vector<1x8x512xf32> to vector<8x512xf32>
    %c0_5 = arith.constant 0 : index
    %c0_6 = arith.constant 0 : index
    %c0_7 = arith.constant 0 : index
    %6 = vector.load %arg4[%c0_5, %c0_6, %c0_7] : memref<1x512x128xf32, #tpu.memory_space<vmem>>, vector<1x512x128xf32>
    %7 = vector.shape_cast %6 : vector<1x512x128xf32> to vector<512x128xf32>
    %cst = arith.constant dense<0.000000e+00> : vector<8x128xf32>
    %8 = tpu.matmul %5, %7, %cst {dimension_numbers = #tpu.dot_dimension_numbers<[1], [0], [0], [1], [0, 0, 1, 1], [], []>} : vector<8x512xf32>, vector<512x128xf32>, vector<8x128xf32> -> vector<8x128xf32>
    %9 = arith.addf %3, %8 : vector<8x128xf32>
    %c0_8 = arith.constant 0 : index
    %c0_9 = arith.constant 0 : index
    %10 = vector.load %arg7[%c0_8, %c0_9] : memref<8x128xf32, #tpu.memory_space<vmem>>, vector<8x128xf32>
    tpu.vector_store %arg7[%c0_8, %c0_9], %9 {strides = array<i32>} : memref<8x128xf32, #tpu.memory_space<vmem>>, vector<8x128xf32>,
    %c1_i32 = arith.constant 1 : i32
    %11 = arith.cmpi eq, %arg2, %c1_i32 : i32
    %12 = arith.extui %11 : i1 to i32
    %c0_i32_10 = arith.constant 0 : i32
    %13 = arith.cmpi ne, %12, %c0_i32_10 : i32
    scf.if %13 {
      %c0_11 = arith.constant 0 : index
      %c0_12 = arith.constant 0 : index
      %14 = vector.load %arg7[%c0_11, %c0_12] : memref<8x128xf32, #tpu.memory_space<vmem>>, vector<8x128xf32>
      %c0_13 = arith.constant 0 : index
      %c0_14 = arith.constant 0 : index
      %c0_15 = arith.constant 0 : index
      %15 = vector.load %arg5[%c0_13, %c0_14, %c0_15] : memref<1x1x128xf32, #tpu.memory_space<vmem>>, vector<1x1x128xf32>
      %16 = vector.shape_cast %15 : vector<1x1x128xf32> to vector<1x128xf32>
      %17 = vector.broadcast %16 : vector<1x128xf32> to vector<8x128xf32>
      %18 = arith.addf %14, %17 : vector<8x128xf32>
      %cst_16 = arith.constant 0.000000e+00 : f32
      %19 = vector.broadcast %cst_16 : f32 to vector<8x128xf32>
      %20 = arith.maximumf %18, %19 : vector<8x128xf32>
      %c0_17 = arith.constant 0 : index
      %c0_18 = arith.constant 0 : index
      %c0_19 = arith.constant 0 : index
      %21 = vector.load %arg6[%c0_17, %c0_18, %c0_19] : memref<1x8x128xf32, #tpu.memory_space<vmem>>, vector<1x8x128xf32>
      %22 = vector.shape_cast %21 : vector<1x8x128xf32> to vector<8x128xf32>
      %23 = vector.shape_cast %20 : vector<8x128xf32> to vector<1x8x128xf32>
      tpu.vector_store %arg6[%c0_17, %c0_18, %c0_19], %23 {strides = array<i32>} : memref<1x8x128xf32, #tpu.memory_space<vmem>>, vector<1x8x128xf32>,
    } else {
    }
    return
  }
  func.func @transform_0(%arg0: i32, %arg1: i32, %arg2: i32) -> (i32, i32, i32) {
    %c0_i32 = arith.constant 0 : i32
    return %arg0, %arg1, %arg2 : i32, i32, i32
  }
  func.func @transform_1(%arg0: i32, %arg1: i32, %arg2: i32) -> (i32, i32, i32) {
    %c0_i32 = arith.constant 0 : i32
    %c0_i32_0 = arith.constant 0 : i32
    return %arg0, %arg2, %c0_i32 : i32, i32, i32
  }
  func.func @transform_2(%arg0: i32, %arg1: i32, %arg2: i32) -> (i32, i32, i32) {
    %c0_i32 = arith.constant 0 : i32
    %c0_i32_0 = arith.constant 0 : i32
    %c0_i32_1 = arith.constant 0 : i32
    return %arg0, %c0_i32, %c0_i32_0 : i32, i32, i32
  }
  func.func @transform_3(%arg0: i32, %arg1: i32, %arg2: i32) -> (i32, i32, i32) {
    %c0_i32 = arith.constant 0 : i32
    %c0_i32_0 = arith.constant 0 : i32
    return %arg0, %arg1, %c0_i32 : i32, i32, i32
  }
}

</mosaic_0001>

<llo_original>
// kernel: combined_network.1
$region0: #{combined_network.1}
  #allocation0 [shape = 'u32[]', space=smem, size = 0x4, offset = 0x4, fixed_abs, tag = 'smem constant byte address 0x4 - core index']
  #allocation1 [shape = 'u32[144,128]{1,0:T(1,128)}', space=vmem, size = 0x12000, scoped, tag = 'internal scratch']
  #allocation2 [shape = 'f32[8,128]{1,0:T(8,128)}', space=vmem, size = 0x1000, scoped, tag = 'scratch operand']
  %s0 = inlined_call_operand.vmem [shape: f32[3,8,1024], index: 0, kind: input, shape index: {}]
  %s1 = inlined_call_operand.vmem [shape: f32[3,1024,128], index: 1, kind: input, shape index: {}]
  %s2 = inlined_call_operand.vmem [shape: f32[3,1,128], index: 2, kind: input, shape index: {}]
  %s3 = inlined_call_operand.vmem [shape: f32[3,8,128], index: 3, kind: output, shape index: {}]
  %s4 = sld [smem:[#allocation0]]
  $region53: #{combined_network.1} parent=0
    _
  %s6 = ssub.s32 1, %s4
  %s7 = scalar_select 0, %s6, %s4
  loop: start=0, step=1, limit=8
  $region2: #{combined_network.1} parent=0 // loop_pre_header
    _
  $region3: #{combined_network.1} parent=0 // loop_header
    %s9 = sphi 0, %s13
    %p10 = scmp.ge.s32.totalorder %s9, 8
    %s16 = sphi 0, %s35
    %s17 = sphi 0, %s31
    %s18 = sphi 0, %s27
    %s19 = sphi 0, %s16
    %s20 = sphi 0, %s17
    %s21 = sphi 0, %s18
    %s22 = sphi 0, %s19
    %s23 = sphi 0, %s20
    %s24 = sphi 0, %s21
    %s42 = sphi 0, %s44
    %s45 = sphi 0, %s42
    %s46 = sphi 0, %s45
    %s62 = sphi 0, %s46
    %s70 = sphi 0, %s72
    %s73 = sphi 0, %s70
    %s74 = sphi 0, %s73
    %s90 = sphi 0, %s74
    %s96 = sphi 0, %s98
    %s99 = sphi 0, %s96
    %s100 = sphi 0, %s99
    %s116 = sphi 0, %s100
    %s124 = sphi 0, %s126
    %s127 = sphi 0, %s124
    %s128 = sphi 0, %s127
    %s144 = sphi 0, %s128
  $region4: #{combined_network.1} parent=0 // loop_header_branch
    %12 = sbr.rel (%p10) target = $region8
  $region5: #{combined_network.1} parent=0 // loop_body
    %s14 = ssub.s32 %s9, 1
    %s15 = ssub.s32 %s9, 2
    %s25 = sadd.s32 1, %s18
    %p26 = scmp.ge.s32.totalorder %s25, 2
    %s27 = scalar_select %p26, 0, %s25
    %s28 = sadd.s32 1, %s17
    %s29 = scalar_select %p26, %s28, %s17
    %p30 = scmp.ge.s32.totalorder %s29, 1
    %s31 = scalar_select %p30, 0, %s29
    %s32 = sadd.s32 1, %s16
    %s33 = scalar_select %p30, %s32, %s16
    %p34 = scmp.ge.s32.totalorder %s33, 3
    %s35 = scalar_select %p34, 0, %s33
    %s36 = ssub.s32 %s16, %s35
    %s37 = ssub.s32 %s17, %s31
    %s38 = sor.u32 %s36, %s37
    %s39 = ssub.s32 %s18, %s27
    %s40 = sor.u32 %s38, %s39
    %p41 = scmp.eq.s32.totalorder %s40, 0
    %s43 = sadd.s32 %s42, 1
    %s44 = scalar_select %p41, %s42, %s43
    %p47 = pneg %p41
    %p48 = scmp.eq.s32.totalorder %s9, 5
    %p49 = por %p47, %p48
    %p50 = scmp.ne.s32.totalorder %s42, %s45
    %p51 = scmp.eq.s32.totalorder %s9, 0
    %p52 = por %p50, %p51
    %p53 = scmp.ne.s32.totalorder %s42, %s45
    %p54 = scmp.eq.s32.totalorder %s14, 5
    %p55 = por %p53, %p54
    %p56 = scmp.ne.s32.totalorder %s45, %s46
    %p57 = scmp.eq.s32.totalorder %s14, 0
    %p58 = por %p56, %p57
    %p59 = scmp.ne.s32.totalorder %s45, %s46
    %p60 = scmp.eq.s32.totalorder %s15, 5
    %p61 = por %p59, %p60
    %p63 = scmp.ne.s32.totalorder %s46, %s62
    %p64 = scmp.eq.s32.totalorder %s15, 0
    %p65 = por %p63, %p64
    %s66 = ssub.s32 %s16, %s35
    %s67 = ssub.s32 %s18, %s27
    %s68 = sor.u32 %s66, %s67
    %p69 = scmp.eq.s32.totalorder %s68, 0
    %s71 = sadd.s32 %s70, 1
    %s72 = scalar_select %p69, %s70, %s71
    %p75 = pneg %p69
    %p76 = scmp.eq.s32.totalorder %s9, 5
    %p77 = por %p75, %p76
    %p78 = scmp.ne.s32.totalorder %s70, %s73
    %p79 = scmp.eq.s32.totalorder %s9, 0
    %p80 = por %p78, %p79
    %p81 = scmp.ne.s32.totalorder %s70, %s73
    %p82 = scmp.eq.s32.totalorder %s14, 5
    %p83 = por %p81, %p82
    %p84 = scmp.ne.s32.totalorder %s73, %s74
    %p85 = scmp.eq.s32.totalorder %s14, 0
    %p86 = por %p84, %p85
    %p87 = scmp.ne.s32.totalorder %s73, %s74
    %p88 = scmp.eq.s32.totalorder %s15, 5
    %p89 = por %p87, %p88
    %p91 = scmp.ne.s32.totalorder %s74, %s90
    %p92 = scmp.eq.s32.totalorder %s15, 0
    %p93 = por %p91, %p92
    %s94 = ssub.s32 %s16, %s35
    %p95 = scmp.eq.s32.totalorder %s94, 0
    %s97 = sadd.s32 %s96, 1
    %s98 = scalar_select %p95, %s96, %s97
    %p101 = pneg %p95
    %p102 = scmp.eq.s32.totalorder %s9, 5
    %p103 = por %p101, %p102
    %p104 = scmp.ne.s32.totalorder %s96, %s99
    %p105 = scmp.eq.s32.totalorder %s9, 0
    %p106 = por %p104, %p105
    %p107 = scmp.ne.s32.totalorder %s96, %s99
    %p108 = scmp.eq.s32.totalorder %s14, 5
    %p109 = por %p107, %p108
    %p110 = scmp.ne.s32.totalorder %s99, %s100
    %p111 = scmp.eq.s32.totalorder %s14, 0
    %p112 = por %p110, %p111
    %p113 = scmp.ne.s32.totalorder %s99, %s100
    %p114 = scmp.eq.s32.totalorder %s15, 5
    %p115 = por %p113, %p114
    %p117 = scmp.ne.s32.totalorder %s100, %s116
    %p118 = scmp.eq.s32.totalorder %s15, 0
    %p119 = por %p117, %p118
    %s120 = ssub.s32 %s16, %s35
    %s121 = ssub.s32 %s17, %s31
    %s122 = sor.u32 %s120, %s121
    %p123 = scmp.eq.s32.totalorder %s122, 0
    %s125 = sadd.s32 %s124, 1
    %s126 = scalar_select %p123, %s124, %s125
    %p129 = pneg %p123
    %p130 = scmp.eq.s32.totalorder %s9, 5
    %p131 = por %p129, %p130
    %p132 = scmp.ne.s32.totalorder %s124, %s127
    %p133 = scmp.eq.s32.totalorder %s9, 0
    %p134 = por %p132, %p133
    %p135 = scmp.ne.s32.totalorder %s124, %s127
    %p136 = scmp.eq.s32.totalorder %s14, 5
    %p137 = por %p135, %p136
    %p138 = scmp.ne.s32.totalorder %s127, %s128
    %p139 = scmp.eq.s32.totalorder %s14, 0
    %p140 = por %p138, %p139
    %p141 = scmp.ne.s32.totalorder %s127, %s128
    %p142 = scmp.eq.s32.totalorder %s15, 5
    %p143 = por %p141, %p142
    %p145 = scmp.ne.s32.totalorder %s128, %s144
    %p146 = scmp.eq.s32.totalorder %s15, 0
    %p147 = por %p145, %p146
    %p148 = scmp.le.s32.totalorder 1, %s9
    %p149 = scmp.lt.s32.totalorder %s9, 7
    %p150 = pnand %p148, %p149
    %p151 = pneg %p150
    // Predicated region
    $region9: #{combined_network.1} parent=5 // pred_check
      _
    $region10: #{combined_network.1} parent=5 // pred_check_branch
      %153 = sbr.rel (%p150) target = $region12
    $region11: #{combined_network.1} parent=5 // pred_region
      %s154 = ssub.s32 %s9, 1
    $region12: #{combined_network.1} parent=5 // pred_fallthru
      _
    %p155 = scmp.lt.s32.totalorder %s9, 6
    // Predicated region
    $region13: #{combined_network.1} parent=5 // pred_check
      %p156 = pneg %p155
    $region14: #{combined_network.1} parent=5 // pred_check_branch
      %158 = sbr.rel (%p156) target = $region16
    $region15: #{combined_network.1} parent=5 // pred_region
      // Predicated region
      $region17: #{combined_network.1} parent=15 // pred_check
        %p159 = pneg %p52
      $region18: #{combined_network.1} parent=15 // pred_check_branch
        %161 = sbr.rel (%p159) target = $region20
      $region19: #{combined_network.1} parent=15 // pred_region
        %s162 = smul.u32 4, %s18
        %p163 = scmp.lt.s32.totalorder %s16, 2
        %s164 = scalar_select %p163, %s16, 2
        %p165 = scmp.lt.s32.totalorder %s17, 0
        %s166 = scalar_select %p165, %s17, 0
        %p167 = scmp.lt.s32.totalorder %s162, 7
        %s168 = scalar_select %p167, %s162, 7
        %s169 = smul.addr %s166, 8
        %s170 = sadd.s32 %s168, %s169
        %s171 = smul.addr %s164, 8
        %s172 = sadd.s32 %s170, %s171
        %s173 = smul.addr %s172, 8
        %s174 = scalar_lea.vmem %s0, %s173
        %s175 = smul.u32 4, %s18
      $region20: #{combined_network.1} parent=15 // pred_fallthru
        _
      // Predicated region
      $region21: #{combined_network.1} parent=15 // pred_check
        %p176 = pneg %p80
      $region22: #{combined_network.1} parent=15 // pred_check_branch
        %178 = sbr.rel (%p176) target = $region24
      $region23: #{combined_network.1} parent=15 // pred_region
        %s179 = smul.u32 64, %s18
        %p180 = scmp.lt.s32.totalorder %s16, 2
        %s181 = scalar_select %p180, %s16, 2
        %p182 = scmp.lt.s32.totalorder %s179, 127
        %s183 = scalar_select %p182, %s179, 127
        %s184 = smul.addr %s181, 128
        %s185 = sadd.s32 %s183, %s184
        %s186 = smul.addr %s185, 8
        %s187 = scalar_lea.vmem %s1, %s186
        %s188 = smul.u32 64, %s18
      $region24: #{combined_network.1} parent=15 // pred_fallthru
        _
      // Predicated region
      $region25: #{combined_network.1} parent=15 // pred_check
        %p189 = pneg %p106
      $region26: #{combined_network.1} parent=15 // pred_check_branch
        %191 = sbr.rel (%p189) target = $region28
      $region27: #{combined_network.1} parent=15 // pred_region
        %p192 = scmp.lt.s32.totalorder %s16, 2
        %s193 = scalar_select %p192, %s16, 2
        %s194 = scalar_lea.vmem %s2, %s193
      $region28: #{combined_network.1} parent=15 // pred_fallthru
        _
    $region16: #{combined_network.1} parent=5 // pred_fallthru
      _
    %p195 = scmp.le.s32.totalorder 1, %s9
    %p196 = scmp.lt.s32.totalorder %s9, 7
    %p197 = pnand %p195, %p196
    %p198 = pneg %p197
    // Predicated region
    $region29: #{combined_network.1} parent=5 // pred_check
      _
    $region30: #{combined_network.1} parent=5 // pred_check_branch
      %200 = sbr.rel (%p197) target = $region32
    $region31: #{combined_network.1} parent=5 // pred_region
      %s201 = ssub.s32 %s9, 1
      %s202 = smul.u32 4, %s21
      %p203 = scmp.lt.s32.totalorder %s19, 2
      %s204 = scalar_select %p203, %s19, 2
      %p205 = scmp.lt.s32.totalorder %s20, 0
      %s206 = scalar_select %p205, %s20, 0
      %p207 = scmp.lt.s32.totalorder %s202, 7
      %s208 = scalar_select %p207, %s202, 7
      %s209 = smul.addr %s206, 8
      %s210 = sadd.s32 %s208, %s209
      %s211 = smul.addr %s204, 8
      %s212 = sadd.s32 %s210, %s211
      %s213 = smul.addr %s212, 8
      %s214 = scalar_lea.vmem %s0, %s213
      %p215 = pneg %p58
      %p216 = pneg %p55
      %s217 = smul.u32 64, %s21
      %p218 = scmp.lt.s32.totalorder %s19, 2
      %s219 = scalar_select %p218, %s19, 2
      %p220 = scmp.lt.s32.totalorder %s217, 127
      %s221 = scalar_select %p220, %s217, 127
      %s222 = smul.addr %s219, 128
      %s223 = sadd.s32 %s221, %s222
      %s224 = smul.addr %s223, 8
      %s225 = scalar_lea.vmem %s1, %s224
      %p226 = pneg %p86
      %p227 = pneg %p83
      %p228 = scmp.lt.s32.totalorder %s19, 2
      %s229 = scalar_select %p228, %s19, 2
      %s230 = scalar_lea.vmem %s2, %s229
      %p231 = pneg %p112
      %p232 = pneg %p109
      %p233 = pneg %p140
      %p234 = pneg %p137
      %p235 = scmp.lt.s32.totalorder %s19, 2
      %s236 = scalar_select %p235, %s19, 2
      %p237 = scmp.lt.s32.totalorder %s20, 0
      %s238 = scalar_select %p237, %s20, 0
      %s239 = sadd.s32 %s238, %s236
      %s240 = smul.addr %s239, 8
      %s241 = scalar_lea.vmem %s3, %s240
      %s242 = smul.u32 4, %s21
      %p243 = scmp.lt.s32.totalorder %s19, 2
      %s244 = scalar_select %p243, %s19, 2
      %p245 = scmp.lt.s32.totalorder %s20, 0
      %s246 = scalar_select %p245, %s20, 0
      %p247 = scmp.lt.s32.totalorder %s242, 7
      %s248 = scalar_select %p247, %s242, 7
      %s249 = smul.addr %s246, 8
      %s250 = sadd.s32 %s248, %s249
      %s251 = smul.addr %s244, 8
      %s252 = sadd.s32 %s250, %s251
      %s253 = smul.addr %s252, 8
      %s254 = scalar_lea.vmem %s0, %s253
      %s255 = smul.u32 4, %s21
      %s256 = smul.u32 64, %s21
      %p257 = scmp.lt.s32.totalorder %s19, 2
      %s258 = scalar_select %p257, %s19, 2
      %p259 = scmp.lt.s32.totalorder %s256, 127
      %s260 = scalar_select %p259, %s256, 127
      %s261 = smul.addr %s258, 128
      %s262 = sadd.s32 %s260, %s261
      %s263 = smul.addr %s262, 8
      %s264 = scalar_lea.vmem %s1, %s263
      %s265 = smul.u32 64, %s21
      %p266 = scmp.lt.s32.totalorder %s19, 2
      %s267 = scalar_select %p266, %s19, 2
      %s268 = scalar_lea.vmem %s2, %s267
      %p269 = scmp.lt.s32.totalorder %s19, 2
      %s270 = scalar_select %p269, %s19, 2
      %p271 = scmp.lt.s32.totalorder %s20, 0
      %s272 = scalar_select %p271, %s20, 0
      %s273 = sadd.s32 %s272, %s270
      %s274 = smul.addr %s273, 8
      %s275 = scalar_lea.vmem %s3, %s274
      %p276 = scmp.eq.s32.totalorder %s21, 0
      // Predicated region
      $region33: #{combined_network.1} parent=31 // pred_check
        %p277 = pneg %p276
      $region34: #{combined_network.1} parent=31 // pred_check_branch
        %279 = sbr.rel (%p277) target = $region36
      $region35: #{combined_network.1} parent=31 // pred_region
        %280 = vst [vmem:[#allocation2] sm:$0xff] 0.0
      $region36: #{combined_network.1} parent=31 // pred_fallthru
        _
      %v281 = vld [vmem:[#allocation2] sm:$0xff]
      %v282 = vld [vmem:[%s254] sm:$0xff]
      %v283 = vld [vmem:[%s254 + $0x8] sm:$0xff]
      %v284 = vld [vmem:[%s254 + $0x10] sm:$0xff]
      %v285 = vld [vmem:[%s254 + $0x18] sm:$0xff]
      %v286 = vld [vmem:[%s264] sm:$0xff]
      %v287 = vld [vmem:[%s264 + $0x8] sm:$0xff]
      %v288 = vld [vmem:[%s264 + $0x10] sm:$0xff]
      %v289 = vld [vmem:[%s264 + $0x18] sm:$0xff]
      %v290 = vld [vmem:[%s264 + $0x20] sm:$0xff]
      %v291 = vld [vmem:[%s264 + $0x28] sm:$0xff]
      %v292 = vld [vmem:[%s264 + $0x30] sm:$0xff]
      %v293 = vld [vmem:[%s264 + $0x38] sm:$0xff]
      %v294 = vld [vmem:[%s264 + $0x40] sm:$0xff]
      %v295 = vld [vmem:[%s264 + $0x48] sm:$0xff]
      %v296 = vld [vmem:[%s264 + $0x50] sm:$0xff]
      %v297 = vld [vmem:[%s264 + $0x58] sm:$0xff]
      %v298 = vld [vmem:[%s264 + $0x60] sm:$0xff]
      %v299 = vld [vmem:[%s264 + $0x68] sm:$0xff]
      %v300 = vld [vmem:[%s264 + $0x70] sm:$0xff]
      %v301 = vld [vmem:[%s264 + $0x78] sm:$0xff]
      %v302 = vld [vmem:[%s264 + $0x80] sm:$0xff]
      %v303 = vld [vmem:[%s264 + $0x88] sm:$0xff]
      %v304 = vld [vmem:[%s264 + $0x90] sm:$0xff]
      %v305 = vld [vmem:[%s264 + $0x98] sm:$0xff]
      %v306 = vld [vmem:[%s264 + $0xa0] sm:$0xff]
      %v307 = vld [vmem:[%s264 + $0xa8] sm:$0xff]
      %v308 = vld [vmem:[%s264 + $0xb0] sm:$0xff]
      %v309 = vld [vmem:[%s264 + $0xb8] sm:$0xff]
      %v310 = vld [vmem:[%s264 + $0xc0] sm:$0xff]
      %v311 = vld [vmem:[%s264 + $0xc8] sm:$0xff]
      %v312 = vld [vmem:[%s264 + $0xd0] sm:$0xff]
      %v313 = vld [vmem:[%s264 + $0xd8] sm:$0xff]
      %v314 = vld [vmem:[%s264 + $0xe0] sm:$0xff]
      %v315 = vld [vmem:[%s264 + $0xe8] sm:$0xff]
      %v316 = vld [vmem:[%s264 + $0xf0] sm:$0xff]
      %v317 = vld [vmem:[%s264 + $0xf8] sm:$0xff]
      %v318 = vld [vmem:[%s264 + $0x100] sm:$0xff]
      %v319 = vld [vmem:[%s264 + $0x108] sm:$0xff]
      %v320 = vld [vmem:[%s264 + $0x110] sm:$0xff]
      %v321 = vld [vmem:[%s264 + $0x118] sm:$0xff]
      %v322 = vld [vmem:[%s264 + $0x120] sm:$0xff]
      %v323 = vld [vmem:[%s264 + $0x128] sm:$0xff]
      %v324 = vld [vmem:[%s264 + $0x130] sm:$0xff]
      %v325 = vld [vmem:[%s264 + $0x138] sm:$0xff]
      %v326 = vld [vmem:[%s264 + $0x140] sm:$0xff]
      %v327 = vld [vmem:[%s264 + $0x148] sm:$0xff]
      %v328 = vld [vmem:[%s264 + $0x150] sm:$0xff]
      %v329 = vld [vmem:[%s264 + $0x158] sm:$0xff]
      %v330 = vld [vmem:[%s264 + $0x160] sm:$0xff]
      %v331 = vld [vmem:[%s264 + $0x168] sm:$0xff]
      %v332 = vld [vmem:[%s264 + $0x170] sm:$0xff]
      %v333 = vld [vmem:[%s264 + $0x178] sm:$0xff]
      %v334 = vld [vmem:[%s264 + $0x180] sm:$0xff]
      %v335 = vld [vmem:[%s264 + $0x188] sm:$0xff]
      %v336 = vld [vmem:[%s264 + $0x190] sm:$0xff]
      %v337 = vld [vmem:[%s264 + $0x198] sm:$0xff]
      %v338 = vld [vmem:[%s264 + $0x1a0] sm:$0xff]
      %v339 = vld [vmem:[%s264 + $0x1a8] sm:$0xff]
      %v340 = vld [vmem:[%s264 + $0x1b0] sm:$0xff]
      %v341 = vld [vmem:[%s264 + $0x1b8] sm:$0xff]
      %v342 = vld [vmem:[%s264 + $0x1c0] sm:$0xff]
      %v343 = vld [vmem:[%s264 + $0x1c8] sm:$0xff]
      %v344 = vld [vmem:[%s264 + $0x1d0] sm:$0xff]
      %v345 = vld [vmem:[%s264 + $0x1d8] sm:$0xff]
      %v346 = vld [vmem:[%s264 + $0x1e0] sm:$0xff]
      %v347 = vld [vmem:[%s264 + $0x1e8] sm:$0xff]
      %v348 = vld [vmem:[%s264 + $0x1f0] sm:$0xff]
      %v349 = vld [vmem:[%s264 + $0x1f8] sm:$0xff]
      %350 = vmatprep.subr.mxu0 0.0
      %351 = vmatpush1.msra.mxu0 %v286
      %352 = vmatprep.subr.mxu0 0.0
      %353 = vmatpush1.msra.mxu0 %v287
      %354 = vmatprep.subr.mxu0 0.0
      %355 = vmatpush1.msra.mxu0 %v288
      %356 = vmatprep.subr.mxu0 0.0
      %357 = vmatpush1.msra.mxu0 %v289
      %358 = vmatprep.subr.mxu0 0.0
      %359 = vmatpush1.msra.mxu0 %v290
      %360 = vmatprep.subr.mxu0 0.0
      %361 = vmatpush1.msra.mxu0 %v291
      %362 = vmatprep.subr.mxu0 0.0
      %363 = vmatpush1.msra.mxu0 %v292
      %364 = vmatprep.subr.mxu0 0.0
      %365 = vmatpush1.msra.mxu0 %v293
      %366 = vmatprep.subr.mxu0 0.0
      %367 = vmatpush1.msra.mxu0 %v294
      %368 = vmatprep.subr.mxu0 0.0
      %369 = vmatpush1.msra.mxu0 %v295
      %370 = vmatprep.subr.mxu0 0.0
      %371 = vmatpush1.msra.mxu0 %v296
      %372 = vmatprep.subr.mxu0 0.0
      %373 = vmatpush1.msra.mxu0 %v297
      %374 = vmatprep.subr.mxu0 0.0
      %375 = vmatpush1.msra.mxu0 %v298
      %376 = vmatprep.subr.mxu0 0.0
      %377 = vmatpush1.msra.mxu0 %v299
      %378 = vmatprep.subr.mxu0 0.0
      %379 = vmatpush1.msra.mxu0 %v300
      %380 = vmatprep.subr.mxu0 0.0
      %381 = vmatpush1.msra.mxu0 %v301
      %382 = vmatprep.subr.mxu0 0.0
      %383 = vmatpush1.msra.mxu0 %v302
      %384 = vmatprep.subr.mxu0 0.0
      %385 = vmatpush1.msra.mxu0 %v303
      %386 = vmatprep.subr.mxu0 0.0
      %387 = vmatpush1.msra.mxu0 %v304
      %388 = vmatprep.subr.mxu0 0.0
      %389 = vmatpush1.msra.mxu0 %v305
      %390 = vmatprep.subr.mxu0 0.0
      %391 = vmatpush1.msra.mxu0 %v306
      %392 = vmatprep.subr.mxu0 0.0
      %393 = vmatpush1.msra.mxu0 %v307
      %394 = vmatprep.subr.mxu0 0.0
      %395 = vmatpush1.msra.mxu0 %v308
      %396 = vmatprep.subr.mxu0 0.0
      %397 = vmatpush1.msra.mxu0 %v309
      %398 = vmatprep.subr.mxu0 0.0
      %399 = vmatpush1.msra.mxu0 %v310
      %400 = vmatprep.subr.mxu0 0.0
      %401 = vmatpush1.msra.mxu0 %v311
      %402 = vmatprep.subr.mxu0 0.0
      %403 = vmatpush1.msra.mxu0 %v312
      %404 = vmatprep.subr.mxu0 0.0
      %405 = vmatpush1.msra.mxu0 %v313
      %406 = vmatprep.subr.mxu0 0.0
      %407 = vmatpush1.msra.mxu0 %v314
      %408 = vmatprep.subr.mxu0 0.0
      %409 = vmatpush1.msra.mxu0 %v315
      %410 = vmatprep.subr.mxu0 0.0
      %411 = vmatpush1.msra.mxu0 %v316
      %412 = vmatprep.subr.mxu0 0.0
      %413 = vmatpush1.msra.mxu0 %v317
      %414 = vmatprep.mubr.f32.mxu0 %v283
      %415 = vmatmul.mubr.f32.gmra.mrb[0].mxu0 %v282
      %v416 = vpop.f32.mrb[0].mxu0
      %v417 = vadd.f32 0.0, %v416
      %v418 = vpop.f32.mrb[0].mxu0
      %419 = vdwg.mxu0
      %420 = vmatprep.subr.mxu0 0.0
      %421 = vmatpush1.msra.mxu0 %v318
      %422 = vmatprep.subr.mxu0 0.0
      %423 = vmatpush1.msra.mxu0 %v319
      %424 = vmatprep.subr.mxu0 0.0
      %425 = vmatpush1.msra.mxu0 %v320
      %426 = vmatprep.subr.mxu0 0.0
      %427 = vmatpush1.msra.mxu0 %v321
      %428 = vmatprep.subr.mxu0 0.0
      %429 = vmatpush1.msra.mxu0 %v322
      %430 = vmatprep.subr.mxu0 0.0
      %431 = vmatpush1.msra.mxu0 %v323
      %432 = vmatprep.subr.mxu0 0.0
      %433 = vmatpush1.msra.mxu0 %v324
      %434 = vmatprep.subr.mxu0 0.0
      %435 = vmatpush1.msra.mxu0 %v325
      %436 = vmatprep.subr.mxu0 0.0
      %437 = vmatpush1.msra.mxu0 %v326
      %438 = vmatprep.subr.mxu0 0.0
      %439 = vmatpush1.msra.mxu0 %v327
      %440 = vmatprep.subr.mxu0 0.0
      %441 = vmatpush1.msra.mxu0 %v328
      %442 = vmatprep.subr.mxu0 0.0
      %443 = vmatpush1.msra.mxu0 %v329
      %444 = vmatprep.subr.mxu0 0.0
      %445 = vmatpush1.msra.mxu0 %v330
      %446 = vmatprep.subr.mxu0 0.0
      %447 = vmatpush1.msra.mxu0 %v331
      %448 = vmatprep.subr.mxu0 0.0
      %449 = vmatpush1.msra.mxu0 %v332
      %450 = vmatprep.subr.mxu0 0.0
      %451 = vmatpush1.msra.mxu0 %v333
      %452 = vmatprep.subr.mxu0 0.0
      %453 = vmatpush1.msra.mxu0 %v334
      %454 = vmatprep.subr.mxu0 0.0
      %455 = vmatpush1.msra.mxu0 %v335
      %456 = vmatprep.subr.mxu0 0.0
      %457 = vmatpush1.msra.mxu0 %v336
      %458 = vmatprep.subr.mxu0 0.0
      %459 = vmatpush1.msra.mxu0 %v337
      %460 = vmatprep.subr.mxu0 0.0
      %461 = vmatpush1.msra.mxu0 %v338
      %462 = vmatprep.subr.mxu0 0.0
      %463 = vmatpush1.msra.mxu0 %v339
      %464 = vmatprep.subr.mxu0 0.0
      %465 = vmatpush1.msra.mxu0 %v340
      %466 = vmatprep.subr.mxu0 0.0
      %467 = vmatpush1.msra.mxu0 %v341
      %468 = vmatprep.subr.mxu0 0.0
      %469 = vmatpush1.msra.mxu0 %v342
      %470 = vmatprep.subr.mxu0 0.0
      %471 = vmatpush1.msra.mxu0 %v343
      %472 = vmatprep.subr.mxu0 0.0
      %473 = vmatpush1.msra.mxu0 %v344
      %474 = vmatprep.subr.mxu0 0.0
      %475 = vmatpush1.msra.mxu0 %v345
      %476 = vmatprep.subr.mxu0 0.0
      %477 = vmatpush1.msra.mxu0 %v346
      %478 = vmatprep.subr.mxu0 0.0
      %479 = vmatpush1.msra.mxu0 %v347
      %480 = vmatprep.subr.mxu0 0.0
      %481 = vmatpush1.msra.mxu0 %v348
      %482 = vmatprep.subr.mxu0 0.0
      %483 = vmatpush1.msra.mxu0 %v349
      %484 = vmatprep.mubr.f32.mxu0 %v285
      %485 = vmatmul.mubr.f32.gmra.mrb[0].mxu0 %v284
      %v486 = vpop.f32.mrb[0].mxu0
      %v487 = vadd.f32 %v417, %v486
      %v488 = vpop.f32.mrb[0].mxu0
      %489 = vdwg.mxu0
      %v490 = vadd.f32 %v281, %v487
      %491 = vst [vmem:[#allocation2] sm:$0xff] %v490
      %p492 = scmp.eq.s32.totalorder %s21, 1
      // Predicated region
      $region37: #{combined_network.1} parent=31 // pred_check
        %p493 = pneg %p492
      $region38: #{combined_network.1} parent=31 // pred_check_branch
        %495 = sbr.rel (%p493) target = $region40
      $region39: #{combined_network.1} parent=31 // pred_region
        %v496 = vld [vmem:[#allocation2] sm:$0xff]
        %v497 = vld [vmem:[%s268] sm:$0x1]
        %v499 = vlaneseq
        %v500 = vshrl.u32 %v499, 7
        %v501 = vsub.s32 0, %v500
        %v502 = vrot.slane %v497, %v501
        %v504 = vadd.f32 %v496, %v502
        %v505 = vmax.f32 %v504, 0.0
        %506 = vst [vmem:[%s275] sm:$0xff] %v505
      $region40: #{combined_network.1} parent=31 // pred_fallthru
        _
      %p507 = scmp.lt.s32.totalorder %s19, 2
      %s508 = scalar_select %p507, %s19, 2
      %p509 = scmp.lt.s32.totalorder %s20, 0
      %s510 = scalar_select %p509, %s20, 0
      %s511 = sadd.s32 %s510, %s508
      %s512 = smul.addr %s511, 8
      %s513 = scalar_lea.vmem %s3, %s512
      // Predicated region
      $region41: #{combined_network.1} parent=31 // pred_check
        %p514 = pneg %p137
      $region42: #{combined_network.1} parent=31 // pred_check_branch
        %516 = sbr.rel (%p514) target = $region44
      $region43: #{combined_network.1} parent=31 // pred_region
        _
      $region44: #{combined_network.1} parent=31 // pred_fallthru
        _
    $region32: #{combined_network.1} parent=5 // pred_fallthru
      _
    %p517 = scmp.le.s32.totalorder 2, %s9
    // Predicated region
    $region45: #{combined_network.1} parent=5 // pred_check
      %p518 = pneg %p517
    $region46: #{combined_network.1} parent=5 // pred_check_branch
      %520 = sbr.rel (%p518) target = $region48
    $region47: #{combined_network.1} parent=5 // pred_region
      %s521 = ssub.s32 %s9, 2
      // Predicated region
      $region49: #{combined_network.1} parent=47 // pred_check
        %p522 = pneg %p143
      $region50: #{combined_network.1} parent=47 // pred_check_branch
        %524 = sbr.rel (%p522) target = $region52
      $region51: #{combined_network.1} parent=47 // pred_region
        %p525 = scmp.lt.s32.totalorder %s22, 2
        %s526 = scalar_select %p525, %s22, 2
        %p527 = scmp.lt.s32.totalorder %s23, 0
        %s528 = scalar_select %p527, %s23, 0
        %s529 = sadd.s32 %s528, %s526
        %s530 = smul.addr %s529, 8
        %s531 = scalar_lea.vmem %s3, %s530
      $region52: #{combined_network.1} parent=47 // pred_fallthru
        _
    $region48: #{combined_network.1} parent=5 // pred_fallthru
      _
  $region6: #{combined_network.1} parent=0 // loop_footer
    %s13 = sadd.s32 1, %s9
  $region7: #{combined_network.1} parent=0 // loop_footer_branch
    %8 = sbr.rel target = $region3
  $region8: #{combined_network.1} parent=0 // loop_exit
    _

</llo_original>
